<compile_context>
chip_gen: v5e
topology: v5e:2x2
jax: 0.10.0
libtpu: 0.0.40
codegen_flags: <defaults>
</compile_context>

<pallas_src>
import jax
import jax.numpy as jnp
from jax.experimental import pallas as pl
from jax.experimental.pallas import tpu as pltpu

LANE = 128  # padded feature width for every layer


def _round_up(n, m):
    return ((n + m - 1) // m) * m


def _mlp_kernel(x_ref, w_ref, b_ref, o_ref):
    """x_ref: (TB, 128); w_ref: (L, 128, 128); b_ref: (8, 128); o_ref: (TB, 128)."""
    n_layers = w_ref.shape[0]
    h = x_ref[...]
    # Hidden layers: matmul + bias + ReLU (statically unrolled tiny loop).
    for l in range(n_layers - 1):
        h = jnp.dot(h, w_ref[l], preferred_element_type=jnp.float32)
        h = h + b_ref[l:l + 1, :]
        h = jnp.maximum(h, 0.0)
    # Final layer: matmul + bias, no ReLU.
    h = jnp.dot(h, w_ref[n_layers - 1], preferred_element_type=jnp.float32)
    h = h + b_ref[n_layers - 1:n_layers, :]
    o_ref[...] = h.astype(o_ref.dtype)


def mlp_forward(x, params, *, tile_batch=512):
    """x: (B, input_dim) f32.  params: list of (W (in,out), b (1,out)) pairs.

    Returns (B, output_dim) f32, identical math to x @ W1 + b1 -> ReLU -> ... .
    """
    batch, in_dim = x.shape
    out_dim = params[-1][0].shape[1]
    n_layers = len(params)

    # Batch tiling: at most `tile_batch` rows per grid step, multiple of 8 sublanes.
    tb = min(tile_batch, _round_up(batch, 8))
    b_pad = _round_up(batch, tb)

    # Pack & zero-pad everything host-side into lane-dense slabs.
    x_p = jnp.zeros((b_pad, LANE), jnp.float32).at[:batch, :in_dim].set(x)

    w_packed = jnp.zeros((n_layers, LANE, LANE), jnp.float32)
    b_packed = jnp.zeros((8, LANE), jnp.float32)  # rows 0..n_layers-1 hold biases
    for l, (w, b) in enumerate(params):
        w_packed = w_packed.at[l, :w.shape[0], :w.shape[1]].set(w)
        b_packed = b_packed.at[l, :b.shape[1]].set(b[0])

    grid = (b_pad // tb,)

    out = pl.pallas_call(
        _mlp_kernel,
        out_shape=jax.ShapeDtypeStruct((b_pad, LANE), jnp.float32),
        grid=grid,
        in_specs=[
            # Activations: one (tb, 128) tile per grid step.
            pl.BlockSpec((tb, LANE), lambda i: (i, 0)),
            # Weights/biases: constant index_map -> resident, never re-DMA'd.
            pl.BlockSpec((n_layers, LANE, LANE), lambda i: (0, 0, 0)),
            pl.BlockSpec((8, LANE), lambda i: (0, 0)),
        ],
        out_specs=pl.BlockSpec((tb, LANE), lambda i: (i, 0)),
        compiler_params=pltpu.CompilerParams(
            dimension_semantics=("parallel",)),
    )(x_p, w_packed, b_packed)

    return out[:batch, :out_dim]


def init_linear_params(key, in_dim, out_dim):
    """Deterministic PyTorch-style init: U(-1/sqrt(in), 1/sqrt(in))."""
    kw, kb = jax.random.split(key)
    bound = 1.0 / jnp.sqrt(jnp.float32(in_dim))
    # stored as (in, out) == transpose of nn.Linear's (out, in) weight
    w = jax.random.uniform(kw, (in_dim, out_dim), jnp.float32, -bound, bound)
    b = jax.random.uniform(kb, (1, out_dim), jnp.float32, -bound, bound)
    return w, b


def reference_forward(x, params):
    h = x
    for i, (w, b) in enumerate(params):
        h = h @ w + b
        if i < len(params) - 1:
            h = jnp.maximum(h, 0.0)
    return h


if __name__ == "__main__":
    # dacon ddarung: train_csv.drop(['count']) -> 9 features, regression -> 1 output
    input_dim, output_dim = 9, 1
    batch = 8
    dims = [input_dim, 64, 32, 32, 16, output_dim]

    key = jax.random.PRNGKey(0)
    keys = jax.random.split(key, len(dims))  # last key used for x

    params = []
    for i in range(len(dims) - 1):
        params.append(init_linear_params(keys[i], dims[i], dims[i + 1]))

    x = jax.random.normal(keys[-1], (batch, input_dim), jnp.float32)

    out = mlp_forward(x, params)
    out = jax.block_until_ready(out)

    ref = reference_forward(x, params)
    assert out.shape == (batch, output_dim)
    assert jnp.allclose(out, ref, atol=1e-4, rtol=1e-4), "mismatch vs JAX reference"

    # Also check the batched/tiled path (grid > 1) with a larger batch.
    big_batch = 1400  # ~size of the ddarung eval set
    xb = jax.random.normal(jax.random.PRNGKey(1), (big_batch, input_dim), jnp.float32)
    outb = jax.block_until_ready(mlp_forward(xb, params))
    refb = reference_forward(xb, params)
    assert outb.shape == (big_batch, output_dim)
    assert jnp.allclose(outb, refb, atol=1e-4, rtol=1e-4), "mismatch (batched) vs JAX reference"

    print("KERNEL_OK")
</pallas_src>

<mosaic_0001>
module attributes {stable_mosaic.version = 11 : i64} {
  func.func @_mlp_kernel(%arg0: i32, %arg1: memref<8x128xf32, #tpu.memory_space<vmem>>, %arg2: memref<5x128x128xf32, #tpu.memory_space<vmem>>, %arg3: memref<8x128xf32, #tpu.memory_space<vmem>>, %arg4: memref<8x128xf32, #tpu.memory_space<vmem>>) attributes {dimension_semantics = [#tpu.dimension_semantics<parallel>], iteration_bounds = array<i64: 1>, scalar_prefetch = 0 : i64, scratch_operands = 0 : i64, tpu.core_type = #tpu.core_type<tc>, window_params = [{transform_indices = @transform_0, window_bounds = array<i64: 8, 128>}, {pipeline_mode = #tpu.pipeline_mode<synchronous>, transform_indices = @transform_1, window_bounds = array<i64: 5, 128, 128>}, {pipeline_mode = #tpu.pipeline_mode<synchronous>, transform_indices = @transform_2, window_bounds = array<i64: 8, 128>}, {transform_indices = @transform_3, window_bounds = array<i64: 8, 128>}]} {
    %c0 = arith.constant 0 : index
    %c0_0 = arith.constant 0 : index
    %0 = vector.load %arg1[%c0, %c0_0] : memref<8x128xf32, #tpu.memory_space<vmem>>, vector<8x128xf32>
    %c0_1 = arith.constant 0 : index
    %c0_2 = arith.constant 0 : index
    %c0_3 = arith.constant 0 : index
    %1 = vector.load %arg2[%c0_1, %c0_2, %c0_3] : memref<5x128x128xf32, #tpu.memory_space<vmem>>, vector<1x128x128xf32>
    %2 = vector.shape_cast %1 : vector<1x128x128xf32> to vector<128x128xf32>
    %cst = arith.constant dense<0.000000e+00> : vector<8x128xf32>
    %3 = tpu.matmul %0, %2, %cst {dimension_numbers = #tpu.dot_dimension_numbers<[1], [0], [0], [1], [0, 0, 1, 1], [], []>} : vector<8x128xf32>, vector<128x128xf32>, vector<8x128xf32> -> vector<8x128xf32>
    %c0_4 = arith.constant 0 : index
    %c0_5 = arith.constant 0 : index
    %4 = vector.load %arg3[%c0_4, %c0_5] : memref<8x128xf32, #tpu.memory_space<vmem>>, vector<1x128xf32>
    %5 = vector.broadcast %4 : vector<1x128xf32> to vector<8x128xf32>
    %6 = arith.addf %3, %5 : vector<8x128xf32>
    %cst_6 = arith.constant 0.000000e+00 : f32
    %7 = vector.broadcast %cst_6 : f32 to vector<8x128xf32>
    %8 = arith.maximumf %6, %7 : vector<8x128xf32>
    %c1 = arith.constant 1 : index
    %c0_7 = arith.constant 0 : index
    %c0_8 = arith.constant 0 : index
    %9 = vector.load %arg2[%c1, %c0_7, %c0_8] : memref<5x128x128xf32, #tpu.memory_space<vmem>>, vector<1x128x128xf32>
    %10 = vector.shape_cast %9 : vector<1x128x128xf32> to vector<128x128xf32>
    %cst_9 = arith.constant dense<0.000000e+00> : vector<8x128xf32>
    %11 = tpu.matmul %8, %10, %cst_9 {dimension_numbers = #tpu.dot_dimension_numbers<[1], [0], [0], [1], [0, 0, 1, 1], [], []>} : vector<8x128xf32>, vector<128x128xf32>, vector<8x128xf32> -> vector<8x128xf32>
    %c1_10 = arith.constant 1 : index
    %c0_11 = arith.constant 0 : index
    %12 = vector.load %arg3[%c1_10, %c0_11] : memref<8x128xf32, #tpu.memory_space<vmem>>, vector<1x128xf32>
    %13 = vector.broadcast %12 : vector<1x128xf32> to vector<8x128xf32>
    %14 = arith.addf %11, %13 : vector<8x128xf32>
    %cst_12 = arith.constant 0.000000e+00 : f32
    %15 = vector.broadcast %cst_12 : f32 to vector<8x128xf32>
    %16 = arith.maximumf %14, %15 : vector<8x128xf32>
    %c2 = arith.constant 2 : index
    %c0_13 = arith.constant 0 : index
    %c0_14 = arith.constant 0 : index
    %17 = vector.load %arg2[%c2, %c0_13, %c0_14] : memref<5x128x128xf32, #tpu.memory_space<vmem>>, vector<1x128x128xf32>
    %18 = vector.shape_cast %17 : vector<1x128x128xf32> to vector<128x128xf32>
    %cst_15 = arith.constant dense<0.000000e+00> : vector<8x128xf32>
    %19 = tpu.matmul %16, %18, %cst_15 {dimension_numbers = #tpu.dot_dimension_numbers<[1], [0], [0], [1], [0, 0, 1, 1], [], []>} : vector<8x128xf32>, vector<128x128xf32>, vector<8x128xf32> -> vector<8x128xf32>
    %c2_16 = arith.constant 2 : index
    %c0_17 = arith.constant 0 : index
    %20 = vector.load %arg3[%c2_16, %c0_17] : memref<8x128xf32, #tpu.memory_space<vmem>>, vector<1x128xf32>
    %21 = vector.broadcast %20 : vector<1x128xf32> to vector<8x128xf32>
    %22 = arith.addf %19, %21 : vector<8x128xf32>
    %cst_18 = arith.constant 0.000000e+00 : f32
    %23 = vector.broadcast %cst_18 : f32 to vector<8x128xf32>
    %24 = arith.maximumf %22, %23 : vector<8x128xf32>
    %c3 = arith.constant 3 : index
    %c0_19 = arith.constant 0 : index
    %c0_20 = arith.constant 0 : index
    %25 = vector.load %arg2[%c3, %c0_19, %c0_20] : memref<5x128x128xf32, #tpu.memory_space<vmem>>, vector<1x128x128xf32>
    %26 = vector.shape_cast %25 : vector<1x128x128xf32> to vector<128x128xf32>
    %cst_21 = arith.constant dense<0.000000e+00> : vector<8x128xf32>
    %27 = tpu.matmul %24, %26, %cst_21 {dimension_numbers = #tpu.dot_dimension_numbers<[1], [0], [0], [1], [0, 0, 1, 1], [], []>} : vector<8x128xf32>, vector<128x128xf32>, vector<8x128xf32> -> vector<8x128xf32>
    %c3_22 = arith.constant 3 : index
    %c0_23 = arith.constant 0 : index
    %28 = vector.load %arg3[%c3_22, %c0_23] : memref<8x128xf32, #tpu.memory_space<vmem>>, vector<1x128xf32>
    %29 = vector.broadcast %28 : vector<1x128xf32> to vector<8x128xf32>
    %30 = arith.addf %27, %29 : vector<8x128xf32>
    %cst_24 = arith.constant 0.000000e+00 : f32
    %31 = vector.broadcast %cst_24 : f32 to vector<8x128xf32>
    %32 = arith.maximumf %30, %31 : vector<8x128xf32>
    %c4 = arith.constant 4 : index
    %c0_25 = arith.constant 0 : index
    %c0_26 = arith.constant 0 : index
    %33 = vector.load %arg2[%c4, %c0_25, %c0_26] : memref<5x128x128xf32, #tpu.memory_space<vmem>>, vector<1x128x128xf32>
    %34 = vector.shape_cast %33 : vector<1x128x128xf32> to vector<128x128xf32>
    %cst_27 = arith.constant dense<0.000000e+00> : vector<8x128xf32>
    %35 = tpu.matmul %32, %34, %cst_27 {dimension_numbers = #tpu.dot_dimension_numbers<[1], [0], [0], [1], [0, 0, 1, 1], [], []>} : vector<8x128xf32>, vector<128x128xf32>, vector<8x128xf32> -> vector<8x128xf32>
    %c4_28 = arith.constant 4 : index
    %c0_29 = arith.constant 0 : index
    %36 = vector.load %arg3[%c4_28, %c0_29] : memref<8x128xf32, #tpu.memory_space<vmem>>, vector<1x128xf32>
    %37 = vector.broadcast %36 : vector<1x128xf32> to vector<8x128xf32>
    %38 = arith.addf %35, %37 : vector<8x128xf32>
    %c0_30 = arith.constant 0 : index
    %c0_31 = arith.constant 0 : index
    %39 = vector.load %arg4[%c0_30, %c0_31] : memref<8x128xf32, #tpu.memory_space<vmem>>, vector<8x128xf32>
    tpu.vector_store %arg4[%c0_30, %c0_31], %38 {strides = array<i32>} : memref<8x128xf32, #tpu.memory_space<vmem>>, vector<8x128xf32>,
    return
  }
  func.func @transform_0(%arg0: i32) -> (i32, i32) {
    %c0_i32 = arith.constant 0 : i32
    %c0_i32_0 = arith.constant 0 : i32
    return %arg0, %c0_i32 : i32, i32
  }
  func.func @transform_1(%arg0: i32) -> (i32, i32, i32) {
    %c0_i32 = arith.constant 0 : i32
    %c0_i32_0 = arith.constant 0 : i32
    %c0_i32_1 = arith.constant 0 : i32
    %c0_i32_2 = arith.constant 0 : i32
    return %c0_i32, %c0_i32_0, %c0_i32_1 : i32, i32, i32
  }
  func.func @transform_2(%arg0: i32) -> (i32, i32) {
    %c0_i32 = arith.constant 0 : i32
    %c0_i32_0 = arith.constant 0 : i32
    %c0_i32_1 = arith.constant 0 : i32
    return %c0_i32, %c0_i32_0 : i32, i32
  }
  func.func @transform_3(%arg0: i32) -> (i32, i32) {
    %c0_i32 = arith.constant 0 : i32
    %c0_i32_0 = arith.constant 0 : i32
    return %arg0, %c0_i32 : i32, i32
  }
}

</mosaic_0001>

<llo_original>
// kernel: tpu_custom_call.1
$region0: #{tpu_custom_call.1}
  #allocation0 [shape = 'u32[]', space=smem, size = 0x4, offset = 0x4, fixed_abs, tag = 'smem constant byte address 0x4 - core index']
  #allocation1 [shape = 'u32[72,128]{1,0:T(1,128)}', space=vmem, size = 0x9000, scoped, tag = 'internal scratch']
  %s0 = inlined_call_operand.hbm [shape: f32[8,128], index: 0, kind: input, shape index: {}]
  %s1 = inlined_call_operand.hbm [shape: f32[5,128,128], index: 1, kind: input, shape index: {}]
  %s2 = inlined_call_operand.hbm [shape: f32[8,128], index: 2, kind: input, shape index: {}]
  %s3 = inlined_call_operand.hbm [shape: f32[8,128], index: 3, kind: output, shape index: {}]
  %s4 = sld [smem:[#allocation0]]
  $region34: #{tpu_custom_call.1} parent=0
    _
  %s6 = ssub.s32 1, %s4
  %s7 = scalar_select 0, %s6, %s4
  $region1: #{tpu_custom_call.1} parent=0
    #allocation2 [shape = 'u8[4096]{0}', space=vmem, size = 0x1000, scoped, tag = 'input window, operand 0, single buffered']
    #allocation3 [shape = 's32[1]{0}', space=sflag, size = 0x4, scoped, tag = 'scoped memory for tpu_custom_call.1']
    #allocation4 [shape = 's32[1]{0}', space=sflag, size = 0x4, scoped, tag = 'scoped memory for tpu_custom_call.1']
    #allocation5 [shape = 'u8[327680]{0}', space=vmem, size = 0x50000, scoped, tag = 'input window, operand 1, single buffered']
    #allocation6 [shape = 's32[1]{0}', space=sflag, size = 0x4, scoped, tag = 'scoped memory for tpu_custom_call.1']
    #allocation7 [shape = 'u8[4096]{0}', space=vmem, size = 0x1000, scoped, tag = 'input window, operand 2, single buffered']
    #allocation8 [shape = 'u8[4096]{0}', space=vmem, size = 0x1000, scoped, tag = 'output window, operand 0, single buffered']
    %8 = vsyncpa [#allocation3], 0
    %9 = vsyncpa [#allocation6], 0
    %10 = vsyncpa [#allocation4], 0
    // Predicated region
    $region2: #{tpu_custom_call.1} parent=1 // pred_check
      _
    $region3: #{tpu_custom_call.1} parent=1 // pred_check_branch
      %12 = sbr.rel (0) target = $region5
    $region4: #{tpu_custom_call.1} parent=1 // pred_region
      %14 = vsyncadd [#allocation3], 0
      %s16 = sshll.u32 %s0, 4
      %s17 = int_to_ptr.hbm [resolvable:$true] %s16
      %s18 = sshll.u32 [#allocation2], 4
      %s19 = int_to_ptr.vmem [resolvable:$true] %s18
      %21 = dma.hbm_to_vmem [thread:$0]  %s17, 128, %s19, [#allocation3]
    $region5: #{tpu_custom_call.1} parent=1 // pred_fallthru
      _
    // Predicated region
    $region6: #{tpu_custom_call.1} parent=1 // pred_check
      _
    $region7: #{tpu_custom_call.1} parent=1 // pred_check_branch
      %23 = sbr.rel (0) target = $region9
    $region8: #{tpu_custom_call.1} parent=1 // pred_region
      %25 = vsyncadd [#allocation6], 0
      %s26 = sshll.u32 %s1, 4
      %s27 = int_to_ptr.hbm [resolvable:$true] %s26
      %s28 = sshll.u32 [#allocation5], 4
      %s29 = int_to_ptr.vmem [resolvable:$true] %s28
      %34 = dma.hbm_to_vmem [thread:$0]  %s27, 10240, %s29, [#allocation6], 128, 128, 8
    $region9: #{tpu_custom_call.1} parent=1 // pred_fallthru
      _
    // Predicated region
    $region10: #{tpu_custom_call.1} parent=1 // pred_check
      _
    $region11: #{tpu_custom_call.1} parent=1 // pred_check_branch
      %36 = sbr.rel (0) target = $region13
    $region12: #{tpu_custom_call.1} parent=1 // pred_region
      %38 = vsyncadd [#allocation6], 0
      %s40 = sshll.u32 %s2, 4
      %s41 = int_to_ptr.hbm [resolvable:$true] %s40
      %s42 = sshll.u32 [#allocation7], 4
      %s43 = int_to_ptr.vmem [resolvable:$true] %s42
      %45 = dma.hbm_to_vmem [thread:$0]  %s41, 128, %s43, [#allocation6]
    $region13: #{tpu_custom_call.1} parent=1 // pred_fallthru
      _
    // Predicated region
    $region14: #{tpu_custom_call.1} parent=1 // pred_check
      _
    $region15: #{tpu_custom_call.1} parent=1 // pred_check_branch
      %47 = sbr.rel (0) target = $region17
    $region16: #{tpu_custom_call.1} parent=1 // pred_region
      %49 = dma.done [#allocation3], 128
    $region17: #{tpu_custom_call.1} parent=1 // pred_fallthru
      _
    // Predicated region
    $region18: #{tpu_custom_call.1} parent=1 // pred_check
      _
    $region19: #{tpu_custom_call.1} parent=1 // pred_check_branch
      %51 = sbr.rel (0) target = $region21
    $region20: #{tpu_custom_call.1} parent=1 // pred_region
      %53 = dma.done [#allocation6], 10240
    $region21: #{tpu_custom_call.1} parent=1 // pred_fallthru
      _
    // Predicated region
    $region22: #{tpu_custom_call.1} parent=1 // pred_check
      _
    $region23: #{tpu_custom_call.1} parent=1 // pred_check_branch
      %55 = sbr.rel (0) target = $region25
    $region24: #{tpu_custom_call.1} parent=1 // pred_region
      %57 = dma.done [#allocation6], 128
    $region25: #{tpu_custom_call.1} parent=1 // pred_fallthru
      _
    %v58 = vld [vmem:[#allocation2] sm:$0xff]
    %v59 = vld [vmem:[#allocation5] sm:$0xff]
    %v60 = vld [vmem:[#allocation5 + $0x8] sm:$0xff]
    %v61 = vld [vmem:[#allocation5 + $0x10] sm:$0xff]
    %v62 = vld [vmem:[#allocation5 + $0x18] sm:$0xff]
    %v63 = vld [vmem:[#allocation5 + $0x20] sm:$0xff]
    %v64 = vld [vmem:[#allocation5 + $0x28] sm:$0xff]
    %v65 = vld [vmem:[#allocation5 + $0x30] sm:$0xff]
    %v66 = vld [vmem:[#allocation5 + $0x38] sm:$0xff]
    %v67 = vld [vmem:[#allocation5 + $0x40] sm:$0xff]
    %v68 = vld [vmem:[#allocation5 + $0x48] sm:$0xff]
    %v69 = vld [vmem:[#allocation5 + $0x50] sm:$0xff]
    %v70 = vld [vmem:[#allocation5 + $0x58] sm:$0xff]
    %v71 = vld [vmem:[#allocation5 + $0x60] sm:$0xff]
    %v72 = vld [vmem:[#allocation5 + $0x68] sm:$0xff]
    %v73 = vld [vmem:[#allocation5 + $0x70] sm:$0xff]
    %v74 = vld [vmem:[#allocation5 + $0x78] sm:$0xff]
    %v75 = vld [vmem:[#allocation7] sm:$0x1]
    %v76 = vperm.slane %v75, 0
    %77 = vmatpush.msra.mxu0 %v74
    %78 = vmatpush.msra.mxu0 %v73
    %79 = vmatpush.msra.mxu0 %v72
    %80 = vmatpush.msra.mxu0 %v71
    %81 = vmatpush.msra.mxu0 %v70
    %82 = vmatpush.msra.mxu0 %v69
    %83 = vmatpush.msra.mxu0 %v68
    %84 = vmatpush.msra.mxu0 %v67
    %85 = vmatpush.msra.mxu0 %v66
    %86 = vmatpush.msra.mxu0 %v65
    %87 = vmatpush.msra.mxu0 %v64
    %88 = vmatpush.msra.mxu0 %v63
    %89 = vmatpush.msra.mxu0 %v62
    %90 = vmatpush.msra.mxu0 %v61
    %91 = vmatpush.msra.mxu0 %v60
    %92 = vmatpush.msra.mxu0 %v59
    %93 = vmatmul.f32.gmra.mxu0 %v58
    %v94 = vpop.f32.mrf.mxu0
    %v95 = vadd.f32 %v76, %v94
    %96 = vdwg.mxu0
    %v97 = vmax.f32 %v95, 0.0
    %s98 = scalar_lea.vmem [#allocation5], 128
    %v99 = vld [vmem:[%s98] sm:$0xff]
    %v100 = vld [vmem:[%s98 + $0x8] sm:$0xff]
    %v101 = vld [vmem:[%s98 + $0x10] sm:$0xff]
    %v102 = vld [vmem:[%s98 + $0x18] sm:$0xff]
    %v103 = vld [vmem:[%s98 + $0x20] sm:$0xff]
    %v104 = vld [vmem:[%s98 + $0x28] sm:$0xff]
    %v105 = vld [vmem:[%s98 + $0x30] sm:$0xff]
    %v106 = vld [vmem:[%s98 + $0x38] sm:$0xff]
    %v107 = vld [vmem:[%s98 + $0x40] sm:$0xff]
    %v108 = vld [vmem:[%s98 + $0x48] sm:$0xff]
    %v109 = vld [vmem:[%s98 + $0x50] sm:$0xff]
    %v110 = vld [vmem:[%s98 + $0x58] sm:$0xff]
    %v111 = vld [vmem:[%s98 + $0x60] sm:$0xff]
    %v112 = vld [vmem:[%s98 + $0x68] sm:$0xff]
    %v113 = vld [vmem:[%s98 + $0x70] sm:$0xff]
    %v114 = vld [vmem:[%s98 + $0x78] sm:$0xff]
    %v115 = vld [vmem:[#allocation7 + $0x1] sm:$0x1]
    %v116 = vperm.slane %v115, 0
    %117 = vmatpush.msra.mxu0 %v114
    %118 = vmatpush.msra.mxu0 %v113
    %119 = vmatpush.msra.mxu0 %v112
    %120 = vmatpush.msra.mxu0 %v111
    %121 = vmatpush.msra.mxu0 %v110
    %122 = vmatpush.msra.mxu0 %v109
    %123 = vmatpush.msra.mxu0 %v108
    %124 = vmatpush.msra.mxu0 %v107
    %125 = vmatpush.msra.mxu0 %v106
    %126 = vmatpush.msra.mxu0 %v105
    %127 = vmatpush.msra.mxu0 %v104
    %128 = vmatpush.msra.mxu0 %v103
    %129 = vmatpush.msra.mxu0 %v102
    %130 = vmatpush.msra.mxu0 %v101
    %131 = vmatpush.msra.mxu0 %v100
    %132 = vmatpush.msra.mxu0 %v99
    %133 = vmatmul.f32.gmra.mxu0 %v97
    %v134 = vpop.f32.mrf.mxu0
    %v135 = vadd.f32 %v116, %v134
    %136 = vdwg.mxu0
    %v137 = vmax.f32 %v135, 0.0
    %s138 = scalar_lea.vmem [#allocation5], 256
    %v139 = vld [vmem:[%s138] sm:$0xff]
    %v140 = vld [vmem:[%s138 + $0x8] sm:$0xff]
    %v141 = vld [vmem:[%s138 + $0x10] sm:$0xff]
    %v142 = vld [vmem:[%s138 + $0x18] sm:$0xff]
    %v143 = vld [vmem:[%s138 + $0x20] sm:$0xff]
    %v144 = vld [vmem:[%s138 + $0x28] sm:$0xff]
    %v145 = vld [vmem:[%s138 + $0x30] sm:$0xff]
    %v146 = vld [vmem:[%s138 + $0x38] sm:$0xff]
    %v147 = vld [vmem:[%s138 + $0x40] sm:$0xff]
    %v148 = vld [vmem:[%s138 + $0x48] sm:$0xff]
    %v149 = vld [vmem:[%s138 + $0x50] sm:$0xff]
    %v150 = vld [vmem:[%s138 + $0x58] sm:$0xff]
    %v151 = vld [vmem:[%s138 + $0x60] sm:$0xff]
    %v152 = vld [vmem:[%s138 + $0x68] sm:$0xff]
    %v153 = vld [vmem:[%s138 + $0x70] sm:$0xff]
    %v154 = vld [vmem:[%s138 + $0x78] sm:$0xff]
    %v155 = vld [vmem:[#allocation7 + $0x2] sm:$0x1]
    %v156 = vperm.slane %v155, 0
    %157 = vmatpush.msra.mxu0 %v154
    %158 = vmatpush.msra.mxu0 %v153
    %159 = vmatpush.msra.mxu0 %v152
    %160 = vmatpush.msra.mxu0 %v151
    %161 = vmatpush.msra.mxu0 %v150
    %162 = vmatpush.msra.mxu0 %v149
    %163 = vmatpush.msra.mxu0 %v148
    %164 = vmatpush.msra.mxu0 %v147
    %165 = vmatpush.msra.mxu0 %v146
    %166 = vmatpush.msra.mxu0 %v145
    %167 = vmatpush.msra.mxu0 %v144
    %168 = vmatpush.msra.mxu0 %v143
    %169 = vmatpush.msra.mxu0 %v142
    %170 = vmatpush.msra.mxu0 %v141
    %171 = vmatpush.msra.mxu0 %v140
    %172 = vmatpush.msra.mxu0 %v139
    %173 = vmatmul.f32.gmra.mxu0 %v137
    %v174 = vpop.f32.mrf.mxu0
    %v175 = vadd.f32 %v156, %v174
    %176 = vdwg.mxu0
    %v177 = vmax.f32 %v175, 0.0
    %s178 = scalar_lea.vmem [#allocation5], 384
    %v179 = vld [vmem:[%s178] sm:$0xff]
    %v180 = vld [vmem:[%s178 + $0x8] sm:$0xff]
    %v181 = vld [vmem:[%s178 + $0x10] sm:$0xff]
    %v182 = vld [vmem:[%s178 + $0x18] sm:$0xff]
    %v183 = vld [vmem:[%s178 + $0x20] sm:$0xff]
    %v184 = vld [vmem:[%s178 + $0x28] sm:$0xff]
    %v185 = vld [vmem:[%s178 + $0x30] sm:$0xff]
    %v186 = vld [vmem:[%s178 + $0x38] sm:$0xff]
    %v187 = vld [vmem:[%s178 + $0x40] sm:$0xff]
    %v188 = vld [vmem:[%s178 + $0x48] sm:$0xff]
    %v189 = vld [vmem:[%s178 + $0x50] sm:$0xff]
    %v190 = vld [vmem:[%s178 + $0x58] sm:$0xff]
    %v191 = vld [vmem:[%s178 + $0x60] sm:$0xff]
    %v192 = vld [vmem:[%s178 + $0x68] sm:$0xff]
    %v193 = vld [vmem:[%s178 + $0x70] sm:$0xff]
    %v194 = vld [vmem:[%s178 + $0x78] sm:$0xff]
    %v195 = vld [vmem:[#allocation7 + $0x3] sm:$0x1]
    %v196 = vperm.slane %v195, 0
    %197 = vmatpush.msra.mxu0 %v194
    %198 = vmatpush.msra.mxu0 %v193
    %199 = vmatpush.msra.mxu0 %v192
    %200 = vmatpush.msra.mxu0 %v191
    %201 = vmatpush.msra.mxu0 %v190
    %202 = vmatpush.msra.mxu0 %v189
    %203 = vmatpush.msra.mxu0 %v188
    %204 = vmatpush.msra.mxu0 %v187
    %205 = vmatpush.msra.mxu0 %v186
    %206 = vmatpush.msra.mxu0 %v185
    %207 = vmatpush.msra.mxu0 %v184
    %208 = vmatpush.msra.mxu0 %v183
    %209 = vmatpush.msra.mxu0 %v182
    %210 = vmatpush.msra.mxu0 %v181
    %211 = vmatpush.msra.mxu0 %v180
    %212 = vmatpush.msra.mxu0 %v179
    %213 = vmatmul.f32.gmra.mxu0 %v177
    %v214 = vpop.f32.mrf.mxu0
    %v215 = vadd.f32 %v196, %v214
    %216 = vdwg.mxu0
    %v217 = vmax.f32 %v215, 0.0
    %s218 = scalar_lea.vmem [#allocation5], 512
    %v219 = vld [vmem:[%s218] sm:$0xff]
    %v220 = vld [vmem:[%s218 + $0x8] sm:$0xff]
    %v221 = vld [vmem:[%s218 + $0x10] sm:$0xff]
    %v222 = vld [vmem:[%s218 + $0x18] sm:$0xff]
    %v223 = vld [vmem:[%s218 + $0x20] sm:$0xff]
    %v224 = vld [vmem:[%s218 + $0x28] sm:$0xff]
    %v225 = vld [vmem:[%s218 + $0x30] sm:$0xff]
    %v226 = vld [vmem:[%s218 + $0x38] sm:$0xff]
    %v227 = vld [vmem:[%s218 + $0x40] sm:$0xff]
    %v228 = vld [vmem:[%s218 + $0x48] sm:$0xff]
    %v229 = vld [vmem:[%s218 + $0x50] sm:$0xff]
    %v230 = vld [vmem:[%s218 + $0x58] sm:$0xff]
    %v231 = vld [vmem:[%s218 + $0x60] sm:$0xff]
    %v232 = vld [vmem:[%s218 + $0x68] sm:$0xff]
    %v233 = vld [vmem:[%s218 + $0x70] sm:$0xff]
    %v234 = vld [vmem:[%s218 + $0x78] sm:$0xff]
    %v235 = vld [vmem:[#allocation7 + $0x4] sm:$0x1]
    %v236 = vperm.slane %v235, 0
    %237 = vmatpush.msra.mxu0 %v234
    %238 = vmatpush.msra.mxu0 %v233
    %239 = vmatpush.msra.mxu0 %v232
    %240 = vmatpush.msra.mxu0 %v231
    %241 = vmatpush.msra.mxu0 %v230
    %242 = vmatpush.msra.mxu0 %v229
    %243 = vmatpush.msra.mxu0 %v228
    %244 = vmatpush.msra.mxu0 %v227
    %245 = vmatpush.msra.mxu0 %v226
    %246 = vmatpush.msra.mxu0 %v225
    %247 = vmatpush.msra.mxu0 %v224
    %248 = vmatpush.msra.mxu0 %v223
    %249 = vmatpush.msra.mxu0 %v222
    %250 = vmatpush.msra.mxu0 %v221
    %251 = vmatpush.msra.mxu0 %v220
    %252 = vmatpush.msra.mxu0 %v219
    %253 = vmatmul.f32.gmra.mxu0 %v217
    %v254 = vpop.f32.mrf.mxu0
    %v255 = vadd.f32 %v236, %v254
    %256 = vdwg.mxu0
    %257 = vst [vmem:[#allocation8] sm:$0xff] %v255
    // Predicated region
    $region26: #{tpu_custom_call.1} parent=1 // pred_check
      _
    $region27: #{tpu_custom_call.1} parent=1 // pred_check_branch
      %259 = sbr.rel (0) target = $region29
    $region28: #{tpu_custom_call.1} parent=1 // pred_region
      %261 = vsyncadd [#allocation4], 0
      %s263 = sshll.u32 [#allocation8], 4
      %s264 = int_to_ptr.vmem [resolvable:$true] %s263
      %s265 = sshll.u32 %s3, 4
      %s266 = int_to_ptr.hbm [resolvable:$true] %s265
      %268 = dma.vmem_to_hbm [thread:$0]  %s264, 128, %s266, [#allocation4]
    $region29: #{tpu_custom_call.1} parent=1 // pred_fallthru
      _
    // Predicated region
    $region30: #{tpu_custom_call.1} parent=1 // pred_check
      _
    $region31: #{tpu_custom_call.1} parent=1 // pred_check_branch
      %270 = sbr.rel (0) target = $region33
    $region32: #{tpu_custom_call.1} parent=1 // pred_region
      %272 = dma.done [#allocation4], 128
    $region33: #{tpu_custom_call.1} parent=1 // pred_fallthru
      _
    %273 = vsyncpa [#allocation3], 1
    %274 = vsyncpa [#allocation6], 1
    %275 = vsyncpa [#allocation4], 1

</llo_original>
